<compile_context>
chip_gen: v6e
topology: v6e:2x2x1
jax: 0.10.0
libtpu: 0.0.40
codegen_flags: <defaults>
</compile_context>

<pallas_src>
import functools

import jax
import jax.numpy as jnp
from jax.experimental import pallas as pl
from jax.experimental.pallas import tpu as pltpu

LANE = 128      # fast (lane) axis width
SUBLANE = 8     # slow (sublane) axis width


def _round_up(x: int, m: int) -> int:
    return (x + m - 1) // m * m


# ---------------------------------------------------------------------------
# Kernel
# ---------------------------------------------------------------------------
def _actor_kernel(x_ref, w1_ref, b1_ref, w2_ref, b2_ref, w3_ref, b3_ref, o_ref,
                  *, action_scale: float):
    # x tile: [TB, S] bf16 (natural state_dim lanes); weights bf16 [in, out];
    # biases f32 [1, out].  MXU does bf16 x bf16 -> f32 accumulation; all
    # epilogue math (bias add / ReLU / tanh / scale) stays f32.
    h1 = jnp.dot(x_ref[...], w1_ref[...], preferred_element_type=jnp.float32)
    h1 = jnp.maximum(h1 + b1_ref[...], 0.0)                       # [TB, Hp] f32

    h2 = jnp.dot(h1.astype(jnp.bfloat16), w2_ref[...],
                 preferred_element_type=jnp.float32)
    h2 = jnp.maximum(h2 + b2_ref[...], 0.0)                       # [TB, Hp] f32

    h3 = jnp.dot(h2.astype(jnp.bfloat16), w3_ref[...],
                 preferred_element_type=jnp.float32)
    h3 = h3 + b3_ref[...]                                         # [TB, Ap] f32
    # tanh -> EUP, scale multiply -> VPU; lane-dense (TB, Ap) store.
    o_ref[...] = (jnp.tanh(h3) * action_scale).astype(o_ref.dtype)


# ---------------------------------------------------------------------------
# Parameter preparation (done once, outside the hot path)
# ---------------------------------------------------------------------------
def prepare_actor_params(params, compute_dtype=jnp.bfloat16):
    """Pad hidden/action lanes to multiples of 128 and cast weights to bf16.

    W1 keeps its natural K = state_dim (x is streamed with its natural lane
    width).  Hidden/action padding is exact: padded columns get zero weights
    and zero bias (ReLU(0)=0, tanh(0)=0) and are sliced away after the kernel.
    """
    w1, b1 = params["w1"], params["b1"]
    w2, b2 = params["w2"], params["b2"]
    w3, b3 = params["w3"], params["b3"]
    S, H = w1.shape
    A = w3.shape[1]
    Hp, Ap = _round_up(H, LANE), _round_up(A, LANE)

    def pad2(a, r, c):
        return jnp.pad(a, ((0, r - a.shape[0]), (0, c - a.shape[1])))

    return {
        "w1": pad2(w1, S, Hp).astype(compute_dtype),
        "b1": pad2(b1, 1, Hp).astype(jnp.float32),
        "w2": pad2(w2, Hp, Hp).astype(compute_dtype),
        "b2": pad2(b2, 1, Hp).astype(jnp.float32),
        "w3": pad2(w3, Hp, Ap).astype(compute_dtype),
        "b3": pad2(b3, 1, Ap).astype(jnp.float32),
        "dims": (S, H, A),
    }


# ---------------------------------------------------------------------------
# Resident (constant index_map) BlockSpecs: single-buffer when supported
# ---------------------------------------------------------------------------
def _make_resident_spec_factory():
    """Constant-index blocks are DMA'd once and never re-fetched; single-buffer
    them (pipeline_mode=pl.Buffered(1)) when supported so large weights do not
    occupy 2x VMEM (matters for Hp >= 1024 actors under v7x's 64 MiB).  Fall
    back to the default double buffering on older Pallas versions."""
    const = lambda i: (0, 0)
    if hasattr(pl, "Buffered"):
        try:
            pl.BlockSpec((SUBLANE, LANE), const, pipeline_mode=pl.Buffered(1))
            return (lambda shape: pl.BlockSpec(
                shape, const, pipeline_mode=pl.Buffered(1))), 1
        except Exception:   # unsupported kwarg / buffer count on this version
            pass
    return (lambda shape: pl.BlockSpec(shape, const)), 2


_resident_spec, _WEIGHT_BUFFERS = _make_resident_spec_factory()


# ---------------------------------------------------------------------------
# VMEM budget (exact sum, clamped just under physical VMEM)
# ---------------------------------------------------------------------------
def _physical_vmem_bytes() -> int:
    try:
        cap = int(getattr(pltpu.get_tpu_info(), "vmem_capacity_bytes", 0))
        if cap > 0:
            return cap
    except Exception:
        pass
    return 64 * 1024 * 1024      # conservative default (v7x per-TensorCore)


def _vmem_budget_bytes(tb, s, hp, ap, out_bytes, weight_buffers):
    weights = weight_buffers * (2 * (s * hp + hp * hp + hp * ap)   # bf16 weights
                                + 4 * (2 * hp + ap))               # f32 biases
    io = 2 * tb * (2 * s + out_bytes * ap)       # double-buffered x / out tiles
    interm = 4 * tb * (2 * hp + ap)              # h1, h2, h3 f32 intermediates
    est = weights + io + interm + (4 << 20)      # + Mosaic internal-scratch headroom
    phys = _physical_vmem_bytes()
    # ~56 MiB ceiling on v7x (64 MiB phys), ~112 MiB on 128-MiB generations.
    ceiling = phys - max(8 << 20, phys // 8)
    return int(min(max(est, 32 << 20), ceiling))


# ---------------------------------------------------------------------------
# Batch tiling
# ---------------------------------------------------------------------------
def _choose_batch_tile(batch: int, batch_tile: int):
    bp0 = _round_up(max(batch, 1), SUBLANE)
    tb = _round_up(min(batch_tile, bp0), SUBLANE)
    # v7x: whenever there are >= 2 sublane rows of work, force >= 2 grid steps
    # so the "parallel" batch axis splits across both TensorCores and x/out
    # prefetch overlaps compute.  Harmless no-op on single-TC v5e/v6e.
    if bp0 >= 2 * SUBLANE:
        tb = min(tb, _round_up(pl.cdiv(bp0, 2), SUBLANE))
    grid_len = pl.cdiv(bp0, tb)
    return tb, tb * grid_len, grid_len


# ---------------------------------------------------------------------------
# Host wrapper
# ---------------------------------------------------------------------------
def actor_forward(x, prepared, action_scale, *, batch_tile=1024,
                  out_dtype=jnp.float32):
    """x: [batch, state_dim].  prepared: output of prepare_actor_params.

    out_dtype=jnp.bfloat16 halves the (lane-padded, write-amplified) action
    store if the caller tolerates bf16 actions; default keeps f32 semantics.
    """
    w1, b1 = prepared["w1"], prepared["b1"]
    w2, b2 = prepared["w2"], prepared["b2"]
    w3, b3 = prepared["w3"], prepared["b3"]
    S, _, A = prepared["dims"]
    Hp = w2.shape[0]
    Ap = w3.shape[1]
    assert x.shape[1] == S

    batch = x.shape[0]
    tb, bp, grid_len = _choose_batch_tile(batch, batch_tile)

    # Deliver x in bf16 with its NATURAL lane width S (no 128-lane inflation);
    # only the batch rows are zero-padded (to a multiple of tb) when needed,
    # and those rows are sliced off below so they never escape.
    xp = x.astype(jnp.bfloat16)
    if bp != batch:
        xp = jnp.pad(xp, ((0, bp - batch), (0, 0)))

    kernel = functools.partial(_actor_kernel, action_scale=float(action_scale))

    out = pl.pallas_call(
        kernel,
        out_shape=jax.ShapeDtypeStruct((bp, Ap), out_dtype),
        grid=(grid_len,),
        in_specs=[
            pl.BlockSpec((tb, S), lambda i: (i, 0)),   # x: pipelined batch tiles
            _resident_spec((S, Hp)),                   # W1 (VMEM-resident)
            _resident_spec((1, Hp)),                   # b1
            _resident_spec((Hp, Hp)),                  # W2
            _resident_spec((1, Hp)),                   # b2
            _resident_spec((Hp, Ap)),                  # W3
            _resident_spec((1, Ap)),                   # b3
        ],
        out_specs=pl.BlockSpec((tb, Ap), lambda i: (i, 0)),  # lane-dense store
        compiler_params=pltpu.CompilerParams(
            dimension_semantics=("parallel",),          # dual-TC on v7x
            vmem_limit_bytes=_vmem_budget_bytes(
                tb, S, Hp, Ap,
                out_bytes=jnp.dtype(out_dtype).itemsize,
                weight_buffers=_WEIGHT_BUFFERS),
        ),
    )(xp, w1, b1, w2, b2, w3, b3)

    return out[:batch, :A]


# ---------------------------------------------------------------------------
# Init + reference (f32)
# ---------------------------------------------------------------------------
def init_actor_params(key, state_dim, hidden_dim, action_dim):
    """nn.Linear-style init (uniform +/- 1/sqrt(fan_in)); weights stored [in, out]."""
    ks = jax.random.split(key, 6)

    def lin(kw, kb, fan_in, fan_out):
        bound = 1.0 / jnp.sqrt(fan_in)
        w = jax.random.uniform(kw, (fan_in, fan_out), jnp.float32, -bound, bound)
        b = jax.random.uniform(kb, (1, fan_out), jnp.float32, -bound, bound)
        return w, b

    w1, b1 = lin(ks[0], ks[1], state_dim, hidden_dim)
    w2, b2 = lin(ks[2], ks[3], hidden_dim, hidden_dim)
    w3, b3 = lin(ks[4], ks[5], hidden_dim, action_dim)
    return {"w1": w1, "b1": b1, "w2": w2, "b2": b2, "w3": w3, "b3": b3}


def actor_reference(x, params, action_scale):
    h1 = jnp.maximum(x @ params["w1"] + params["b1"], 0.0)
    h2 = jnp.maximum(h1 @ params["w2"] + params["b2"], 0.0)
    return jnp.tanh(h2 @ params["w3"] + params["b3"]) * action_scale


if __name__ == "__main__":
    state_dim, hidden_dim, action_dim = 16, 32, 8
    action_scale = 2.0

    key = jax.random.PRNGKey(0)
    k_x, k_x2, k_p = jax.random.split(key, 3)
    params = init_actor_params(k_p, state_dim, hidden_dim, action_dim)
    prepared = prepare_actor_params(params)            # pad + bf16 cast (once)

    # Small batch (single grid step).
    x = jax.random.normal(k_x, (2, state_dim), jnp.float32)
    out = jax.block_until_ready(actor_forward(x, prepared, action_scale))
    ref = actor_reference(x, params, action_scale)
    assert out.shape == (2, action_dim)
    # bf16 MXU operands with f32 accumulation -> loosened tolerance vs f32 ref.
    assert jnp.allclose(out, ref, atol=5e-2, rtol=5e-2), float(
        jnp.max(jnp.abs(out - ref)))

    # Medium batch: exercises >= 2 grid steps (dual-TC split on v7x) and the
    # ragged last batch tile (zero row padding, sliced off afterwards).
    x2 = jax.random.normal(k_x2, (100, state_dim), jnp.float32)
    out2 = jax.block_until_ready(actor_forward(x2, prepared, action_scale))
    ref2 = actor_reference(x2, params, action_scale)
    assert out2.shape == (100, action_dim)
    assert jnp.allclose(out2, ref2, atol=5e-2, rtol=5e-2), float(
        jnp.max(jnp.abs(out2 - ref2)))

    print("KERNEL_OK")
</pallas_src>

<mosaic_0001>
module attributes {stable_mosaic.version = 11 : i64} {
  func.func @_actor_kernel(%arg0: i32, %arg1: memref<8x16xbf16, #tpu.memory_space<vmem>>, %arg2: memref<16x128xbf16, #tpu.memory_space<vmem>>, %arg3: memref<1x128xf32, #tpu.memory_space<vmem>>, %arg4: memref<128x128xbf16, #tpu.memory_space<vmem>>, %arg5: memref<1x128xf32, #tpu.memory_space<vmem>>, %arg6: memref<128x128xbf16, #tpu.memory_space<vmem>>, %arg7: memref<1x128xf32, #tpu.memory_space<vmem>>, %arg8: memref<8x128xf32, #tpu.memory_space<vmem>>) attributes {dimension_semantics = [#tpu.dimension_semantics<parallel>], iteration_bounds = array<i64: 1>, scalar_prefetch = 0 : i64, scratch_operands = 0 : i64, tpu.core_type = #tpu.core_type<tc>, window_params = [{transform_indices = @transform_0, window_bounds = array<i64: 8, 16>}, {pipeline_mode = #tpu.pipeline_mode<synchronous>, transform_indices = @transform_1, window_bounds = array<i64: 16, 128>}, {pipeline_mode = #tpu.pipeline_mode<synchronous>, transform_indices = @transform_2, window_bounds = array<i64: 1, 128>}, {pipeline_mode = #tpu.pipeline_mode<synchronous>, transform_indices = @transform_3, window_bounds = array<i64: 128, 128>}, {pipeline_mode = #tpu.pipeline_mode<synchronous>, transform_indices = @transform_4, window_bounds = array<i64: 1, 128>}, {pipeline_mode = #tpu.pipeline_mode<synchronous>, transform_indices = @transform_5, window_bounds = array<i64: 128, 128>}, {pipeline_mode = #tpu.pipeline_mode<synchronous>, transform_indices = @transform_6, window_bounds = array<i64: 1, 128>}, {transform_indices = @transform_7, window_bounds = array<i64: 8, 128>}]} {
    %c0 = arith.constant 0 : index
    %c0_0 = arith.constant 0 : index
    %0 = vector.load %arg1[%c0, %c0_0] : memref<8x16xbf16, #tpu.memory_space<vmem>>, vector<8x16xbf16>
    %c0_1 = arith.constant 0 : index
    %c0_2 = arith.constant 0 : index
    %1 = vector.load %arg2[%c0_1, %c0_2] : memref<16x128xbf16, #tpu.memory_space<vmem>>, vector<16x128xbf16>
    %cst = arith.constant dense<0.000000e+00> : vector<8x128xf32>
    %2 = tpu.matmul %0, %1, %cst {dimension_numbers = #tpu.dot_dimension_numbers<[1], [0], [0], [1], [0, 0, 1, 1], [], []>} : vector<8x16xbf16>, vector<16x128xbf16>, vector<8x128xf32> -> vector<8x128xf32>
    %c0_3 = arith.constant 0 : index
    %c0_4 = arith.constant 0 : index
    %3 = vector.load %arg3[%c0_3, %c0_4] : memref<1x128xf32, #tpu.memory_space<vmem>>, vector<1x128xf32>
    %4 = vector.broadcast %3 : vector<1x128xf32> to vector<8x128xf32>
    %5 = arith.addf %2, %4 : vector<8x128xf32>
    %cst_5 = arith.constant 0.000000e+00 : f32
    %6 = vector.broadcast %cst_5 : f32 to vector<8x128xf32>
    %7 = arith.maximumf %5, %6 : vector<8x128xf32>
    %8 = arith.truncf %7 : vector<8x128xf32> to vector<8x128xbf16>
    %c0_6 = arith.constant 0 : index
    %c0_7 = arith.constant 0 : index
    %9 = vector.load %arg4[%c0_6, %c0_7] : memref<128x128xbf16, #tpu.memory_space<vmem>>, vector<128x128xbf16>
    %cst_8 = arith.constant dense<0.000000e+00> : vector<8x128xf32>
    %10 = tpu.matmul %8, %9, %cst_8 {dimension_numbers = #tpu.dot_dimension_numbers<[1], [0], [0], [1], [0, 0, 1, 1], [], []>} : vector<8x128xbf16>, vector<128x128xbf16>, vector<8x128xf32> -> vector<8x128xf32>
    %c0_9 = arith.constant 0 : index
    %c0_10 = arith.constant 0 : index
    %11 = vector.load %arg5[%c0_9, %c0_10] : memref<1x128xf32, #tpu.memory_space<vmem>>, vector<1x128xf32>
    %12 = vector.broadcast %11 : vector<1x128xf32> to vector<8x128xf32>
    %13 = arith.addf %10, %12 : vector<8x128xf32>
    %cst_11 = arith.constant 0.000000e+00 : f32
    %14 = vector.broadcast %cst_11 : f32 to vector<8x128xf32>
    %15 = arith.maximumf %13, %14 : vector<8x128xf32>
    %16 = arith.truncf %15 : vector<8x128xf32> to vector<8x128xbf16>
    %c0_12 = arith.constant 0 : index
    %c0_13 = arith.constant 0 : index
    %17 = vector.load %arg6[%c0_12, %c0_13] : memref<128x128xbf16, #tpu.memory_space<vmem>>, vector<128x128xbf16>
    %cst_14 = arith.constant dense<0.000000e+00> : vector<8x128xf32>
    %18 = tpu.matmul %16, %17, %cst_14 {dimension_numbers = #tpu.dot_dimension_numbers<[1], [0], [0], [1], [0, 0, 1, 1], [], []>} : vector<8x128xbf16>, vector<128x128xbf16>, vector<8x128xf32> -> vector<8x128xf32>
    %c0_15 = arith.constant 0 : index
    %c0_16 = arith.constant 0 : index
    %19 = vector.load %arg7[%c0_15, %c0_16] : memref<1x128xf32, #tpu.memory_space<vmem>>, vector<1x128xf32>
    %20 = vector.broadcast %19 : vector<1x128xf32> to vector<8x128xf32>
    %21 = arith.addf %18, %20 : vector<8x128xf32>
    %22 = math.tanh %21 : vector<8x128xf32>
    %cst_17 = arith.constant 2.000000e+00 : f32
    %23 = vector.broadcast %cst_17 : f32 to vector<8x128xf32>
    %24 = arith.mulf %22, %23 : vector<8x128xf32>
    %c0_18 = arith.constant 0 : index
    %c0_19 = arith.constant 0 : index
    %25 = vector.load %arg8[%c0_18, %c0_19] : memref<8x128xf32, #tpu.memory_space<vmem>>, vector<8x128xf32>
    tpu.vector_store %arg8[%c0_18, %c0_19], %24 {strides = array<i32>} : memref<8x128xf32, #tpu.memory_space<vmem>>, vector<8x128xf32>,
    return
  }
  func.func @transform_0(%arg0: i32) -> (i32, i32) {
    %c0_i32 = arith.constant 0 : i32
    %c0_i32_0 = arith.constant 0 : i32
    return %arg0, %c0_i32 : i32, i32
  }
  func.func @transform_1(%arg0: i32) -> (i32, i32) {
    %c0_i32 = arith.constant 0 : i32
    %c0_i32_0 = arith.constant 0 : i32
    %c0_i32_1 = arith.constant 0 : i32
    return %c0_i32, %c0_i32_0 : i32, i32
  }
  func.func @transform_2(%arg0: i32) -> (i32, i32) {
    %c0_i32 = arith.constant 0 : i32
    %c0_i32_0 = arith.constant 0 : i32
    %c0_i32_1 = arith.constant 0 : i32
    return %c0_i32, %c0_i32_0 : i32, i32
  }
  func.func @transform_3(%arg0: i32) -> (i32, i32) {
    %c0_i32 = arith.constant 0 : i32
    %c0_i32_0 = arith.constant 0 : i32
    %c0_i32_1 = arith.constant 0 : i32
    return %c0_i32, %c0_i32_0 : i32, i32
  }
  func.func @transform_4(%arg0: i32) -> (i32, i32) {
    %c0_i32 = arith.constant 0 : i32
    %c0_i32_0 = arith.constant 0 : i32
    %c0_i32_1 = arith.constant 0 : i32
    return %c0_i32, %c0_i32_0 : i32, i32
  }
  func.func @transform_5(%arg0: i32) -> (i32, i32) {
    %c0_i32 = arith.constant 0 : i32
    %c0_i32_0 = arith.constant 0 : i32
    %c0_i32_1 = arith.constant 0 : i32
    return %c0_i32, %c0_i32_0 : i32, i32
  }
  func.func @transform_6(%arg0: i32) -> (i32, i32) {
    %c0_i32 = arith.constant 0 : i32
    %c0_i32_0 = arith.constant 0 : i32
    %c0_i32_1 = arith.constant 0 : i32
    return %c0_i32, %c0_i32_0 : i32, i32
  }
  func.func @transform_7(%arg0: i32) -> (i32, i32) {
    %c0_i32 = arith.constant 0 : i32
    %c0_i32_0 = arith.constant 0 : i32
    return %arg0, %c0_i32 : i32, i32
  }
}

</mosaic_0001>

<llo_original>
// kernel: tpu_custom_call.1
$region0: #{tpu_custom_call.1}
  #allocation0 [shape = 'u32[]', space=smem, size = 0x4, offset = 0x4, fixed_abs, tag = 'smem constant byte address 0x4 - core index']
  #allocation1 [shape = 'u32[144,128]{1,0:T(1,128)}', space=vmem, size = 0x12000, scoped, tag = 'internal scratch']
  %s0 = inlined_call_operand.hbm [shape: bf16[8,16], index: 0, kind: input, shape index: {}]
  %s1 = inlined_call_operand.hbm [shape: bf16[16,128], index: 1, kind: input, shape index: {}]
  %s2 = inlined_call_operand.vmem [shape: f32[1,128], index: 2, kind: input, shape index: {}]
  %s3 = inlined_call_operand.hbm [shape: bf16[128,128], index: 3, kind: input, shape index: {}]
  %s4 = inlined_call_operand.vmem [shape: f32[1,128], index: 4, kind: input, shape index: {}]
  %s5 = inlined_call_operand.hbm [shape: bf16[128,128], index: 5, kind: input, shape index: {}]
  %s6 = inlined_call_operand.vmem [shape: f32[1,128], index: 6, kind: input, shape index: {}]
  %s7 = inlined_call_operand.hbm [shape: f32[8,128], index: 7, kind: output, shape index: {}]
  %s8 = sld [smem:[#allocation0]]
  $region54: #{tpu_custom_call.1} parent=0
    _
  %s10 = ssub.s32 1, %s8
  %s11 = scalar_select 0, %s10, %s8
  $region1: #{tpu_custom_call.1} parent=0
    #allocation2 [shape = 'u8[2048]{0}', space=vmem, size = 0x800, scoped, tag = 'input window, operand 0, single buffered']
    #allocation3 [shape = 's32[1]{0}', space=sflag, size = 0x4, scoped, tag = 'scoped memory for tpu_custom_call.1']
    #allocation4 [shape = 's32[1]{0}', space=sflag, size = 0x4, scoped, tag = 'scoped memory for tpu_custom_call.1']
    #allocation5 [shape = 'u8[4096]{0}', space=vmem, size = 0x1000, scoped, tag = 'input window, operand 1, single buffered']
    #allocation6 [shape = 's32[1]{0}', space=sflag, size = 0x4, scoped, tag = 'scoped memory for tpu_custom_call.1']
    #allocation7 [shape = 'u8[32768]{0}', space=vmem, size = 0x8000, scoped, tag = 'input window, operand 3, single buffered']
    #allocation8 [shape = 'u8[32768]{0}', space=vmem, size = 0x8000, scoped, tag = 'input window, operand 5, single buffered']
    #allocation9 [shape = 's32[1]{0}', space=sflag, size = 0x4, scoped, tag = 'scoped memory for tpu_custom_call.1']
    #allocation10 [shape = 'u8[4096]{0}', space=vmem, size = 0x1000, scoped, tag = 'output window, operand 0, single buffered']
    %12 = vsyncpa [#allocation3], 0
    %13 = vsyncpa [#allocation6], 0
    %14 = vsyncpa [#allocation9], 0
    %15 = vsyncpa [#allocation4], 0
    // Predicated region
    $region2: #{tpu_custom_call.1} parent=1 // pred_check
      _
    $region3: #{tpu_custom_call.1} parent=1 // pred_check_branch
      %17 = sbr.rel (0) target = $region5
    $region4: #{tpu_custom_call.1} parent=1 // pred_region
      %s19 = ssub.s32 64, 64
      %20 = vsyncadd [#allocation3], %s19
      %s22 = sshll.u32 [#allocation2], 4
      %s23 = int_to_ptr.vmem [resolvable:$true] %s22
      %25 = dma.hbm_to_vmem [thread:$0]  %s0, 64, %s23, [#allocation3]
    $region5: #{tpu_custom_call.1} parent=1 // pred_fallthru
      _
    // Predicated region
    $region6: #{tpu_custom_call.1} parent=1 // pred_check
      _
    $region7: #{tpu_custom_call.1} parent=1 // pred_check_branch
      %27 = sbr.rel (0) target = $region9
    $region8: #{tpu_custom_call.1} parent=1 // pred_region
      %s29 = ssub.s32 128, 128
      %30 = vsyncadd [#allocation6], %s29
      %s31 = sshll.u32 [#allocation5], 4
      %s32 = int_to_ptr.vmem [resolvable:$true] %s31
      %37 = dma.hbm_to_vmem [thread:$0]  %s1, 128, %s32, [#allocation6], 64, 64, 4
    $region9: #{tpu_custom_call.1} parent=1 // pred_fallthru
      _
    // Predicated region
    $region10: #{tpu_custom_call.1} parent=1 // pred_check
      _
    $region11: #{tpu_custom_call.1} parent=1 // pred_check_branch
      %39 = sbr.rel (0) target = $region13
    $region12: #{tpu_custom_call.1} parent=1 // pred_region
      _
    $region13: #{tpu_custom_call.1} parent=1 // pred_fallthru
      _
    // Predicated region
    $region14: #{tpu_custom_call.1} parent=1 // pred_check
      _
    $region15: #{tpu_custom_call.1} parent=1 // pred_check_branch
      %41 = sbr.rel (0) target = $region17
    $region16: #{tpu_custom_call.1} parent=1 // pred_region
      %s43 = ssub.s32 1024, 1024
      %44 = vsyncadd [#allocation6], %s43
      %s45 = sshll.u32 [#allocation7], 4
      %s46 = int_to_ptr.vmem [resolvable:$true] %s45
      %51 = dma.hbm_to_vmem [thread:$0]  %s3, 1024, %s46, [#allocation6], 64, 64, 4
    $region17: #{tpu_custom_call.1} parent=1 // pred_fallthru
      _
    // Predicated region
    $region18: #{tpu_custom_call.1} parent=1 // pred_check
      _
    $region19: #{tpu_custom_call.1} parent=1 // pred_check_branch
      %53 = sbr.rel (0) target = $region21
    $region20: #{tpu_custom_call.1} parent=1 // pred_region
      _
    $region21: #{tpu_custom_call.1} parent=1 // pred_fallthru
      _
    // Predicated region
    $region22: #{tpu_custom_call.1} parent=1 // pred_check
      _
    $region23: #{tpu_custom_call.1} parent=1 // pred_check_branch
      %55 = sbr.rel (0) target = $region25
    $region24: #{tpu_custom_call.1} parent=1 // pred_region
      %s57 = ssub.s32 1024, 1024
      %58 = vsyncadd [#allocation9], %s57
      %s59 = sshll.u32 [#allocation8], 4
      %s60 = int_to_ptr.vmem [resolvable:$true] %s59
      %65 = dma.hbm_to_vmem [thread:$0]  %s5, 1024, %s60, [#allocation9], 64, 64, 4
    $region25: #{tpu_custom_call.1} parent=1 // pred_fallthru
      _
    // Predicated region
    $region26: #{tpu_custom_call.1} parent=1 // pred_check
      _
    $region27: #{tpu_custom_call.1} parent=1 // pred_check_branch
      %67 = sbr.rel (0) target = $region29
    $region28: #{tpu_custom_call.1} parent=1 // pred_region
      _
    $region29: #{tpu_custom_call.1} parent=1 // pred_fallthru
      _
    // Predicated region
    $region30: #{tpu_custom_call.1} parent=1 // pred_check
      _
    $region31: #{tpu_custom_call.1} parent=1 // pred_check_branch
      %69 = sbr.rel (0) target = $region33
    $region32: #{tpu_custom_call.1} parent=1 // pred_region
      %70 = dma.done [#allocation3], 64
    $region33: #{tpu_custom_call.1} parent=1 // pred_fallthru
      _
    // Predicated region
    $region34: #{tpu_custom_call.1} parent=1 // pred_check
      _
    $region35: #{tpu_custom_call.1} parent=1 // pred_check_branch
      %72 = sbr.rel (0) target = $region37
    $region36: #{tpu_custom_call.1} parent=1 // pred_region
      %73 = dma.done [#allocation6], 128
    $region37: #{tpu_custom_call.1} parent=1 // pred_fallthru
      _
    // Predicated region
    $region38: #{tpu_custom_call.1} parent=1 // pred_check
      _
    $region39: #{tpu_custom_call.1} parent=1 // pred_check_branch
      %75 = sbr.rel (0) target = $region41
    $region40: #{tpu_custom_call.1} parent=1 // pred_region
      %76 = dma.done [#allocation6], 1024
    $region41: #{tpu_custom_call.1} parent=1 // pred_fallthru
      _
    // Predicated region
    $region42: #{tpu_custom_call.1} parent=1 // pred_check
      _
    $region43: #{tpu_custom_call.1} parent=1 // pred_check_branch
      %78 = sbr.rel (0) target = $region45
    $region44: #{tpu_custom_call.1} parent=1 // pred_region
      %79 = dma.done [#allocation9], 1024
    $region45: #{tpu_custom_call.1} parent=1 // pred_fallthru
      _
    %v81 = vld [vmem:[#allocation2] sm:$0xf]
    %v82 = vld [vmem:[#allocation5] sm:$0xf]
    %v83 = vld [vmem:[#allocation5 + $0x4] sm:$0xf]
    %v84 = vld [vmem:[%s2] sm:$0x1]
    %v86 = vlaneseq
    %v87 = vshrl.u32 %v86, 7
    %v88 = vsub.s32 0, %v87
    %v89 = vrot.slane %v84, %v88
    %v93 = vunpack.c.l.b16 %v82
    %v94 = vunpack.c.l.b16 %v83
    %v95 = vpack.c.b16 %v94, %v93
    %vm97 = vcmask 130048
    %v99 = vsel %vm97, %v81, 0
    %101 = vmatprep.subr.bf16.mxu0 0
    %102 = vmatpush1.bf16.msra.mxu0 0
    %103 = vmatprep.subr.bf16.mxu0 0
    %104 = vmatpush1.bf16.msra.mxu0 0
    %105 = vmatprep.subr.bf16.mxu0 0
    %106 = vmatpush1.bf16.msra.mxu0 0
    %107 = vmatprep.subr.bf16.mxu0 0
    %108 = vmatpush1.bf16.msra.mxu0 0
    %109 = vmatprep.subr.bf16.mxu0 0
    %110 = vmatpush1.bf16.msra.mxu0 0
    %111 = vmatprep.subr.bf16.mxu0 0
    %112 = vmatpush1.bf16.msra.mxu0 0
    %113 = vmatprep.subr.bf16.mxu0 0
    %114 = vmatpush1.bf16.msra.mxu0 0
    %115 = vmatprep.subr.bf16.mxu0 0
    %116 = vmatpush1.bf16.msra.mxu0 %v95
    %117 = vmatprep.subr.bf16.mxu0 0
    %118 = vmatpush2.bf16.msra.mxu0 0
    %119 = vmatprep.subr.bf16.mxu0 0
    %120 = vmatpush2.bf16.msra.mxu0 0
    %121 = vmatprep.subr.bf16.mxu0 0
    %122 = vmatpush2.bf16.msra.mxu0 0
    %123 = vmatprep.subr.bf16.mxu0 0
    %124 = vmatpush2.bf16.msra.mxu0 0
    %125 = vmatprep.subr.bf16.mxu0 0
    %126 = vmatpush2.bf16.msra.mxu0 0
    %127 = vmatprep.subr.bf16.mxu0 0
    %128 = vmatpush2.bf16.msra.mxu0 0
    %129 = vmatprep.subr.bf16.mxu0 0
    %130 = vmatpush2.bf16.msra.mxu0 0
    %131 = vmatprep.subr.bf16.mxu0 0
    %132 = vmatpush2.bf16.msra.mxu0 0
    %133 = vmatprep.mubr.bf16.mxu0 0
    %134 = vmatmul.mubr.bf16.gmra.mxu0 %v99
    %v135 = vpop.f32.mrf.mxu0
    %v136 = vadd.f32 %v89, %v135
    %v137 = vpop.f32.mrf.mxu0
    %v138 = vpop.f32.mrf.mxu0
    %v139 = vpop.f32.mrf.mxu0
    %140 = vdwg.mxu0
    %v141 = vmax.f32 %v136, 0.0
    %v142 = vpack.c.bf16 %v141, %v141
    %v143 = vld [vmem:[#allocation7] sm:$0xf]
    %v144 = vld [vmem:[#allocation7 + $0x4] sm:$0xf]
    %v145 = vld [vmem:[#allocation7 + $0x8] sm:$0xf]
    %v146 = vld [vmem:[#allocation7 + $0xc] sm:$0xf]
    %v147 = vld [vmem:[#allocation7 + $0x10] sm:$0xf]
    %v148 = vld [vmem:[#allocation7 + $0x14] sm:$0xf]
    %v149 = vld [vmem:[#allocation7 + $0x18] sm:$0xf]
    %v150 = vld [vmem:[#allocation7 + $0x1c] sm:$0xf]
    %v151 = vld [vmem:[#allocation7 + $0x20] sm:$0xf]
    %v152 = vld [vmem:[#allocation7 + $0x24] sm:$0xf]
    %v153 = vld [vmem:[#allocation7 + $0x28] sm:$0xf]
    %v154 = vld [vmem:[#allocation7 + $0x2c] sm:$0xf]
    %v155 = vld [vmem:[#allocation7 + $0x30] sm:$0xf]
    %v156 = vld [vmem:[#allocation7 + $0x34] sm:$0xf]
    %v157 = vld [vmem:[#allocation7 + $0x38] sm:$0xf]
    %v158 = vld [vmem:[#allocation7 + $0x3c] sm:$0xf]
    %v159 = vld [vmem:[%s4] sm:$0x1]
    %v161 = vlaneseq
    %v162 = vshrl.u32 %v161, 7
    %v163 = vsub.s32 0, %v162
    %v164 = vrot.slane %v159, %v163
    %v182 = vunpack.c.l.b16 %v143
    %v183 = vunpack.c.l.b16 %v144
    %v184 = vunpack.c.l.b16 %v145
    %v185 = vunpack.c.l.b16 %v146
    %v186 = vunpack.c.l.b16 %v147
    %v187 = vunpack.c.l.b16 %v148
    %v188 = vunpack.c.l.b16 %v149
    %v189 = vunpack.c.l.b16 %v150
    %v190 = vunpack.c.l.b16 %v151
    %v191 = vunpack.c.l.b16 %v152
    %v192 = vunpack.c.l.b16 %v153
    %v193 = vunpack.c.l.b16 %v154
    %v194 = vunpack.c.l.b16 %v155
    %v195 = vunpack.c.l.b16 %v156
    %v196 = vunpack.c.l.b16 %v157
    %v197 = vunpack.c.l.b16 %v158
    %v198 = vpack.c.b16 %v183, %v182
    %v199 = vpack.c.b16 %v185, %v184
    %v200 = vpack.c.b16 %v187, %v186
    %v201 = vpack.c.b16 %v189, %v188
    %v202 = vpack.c.b16 %v191, %v190
    %v203 = vpack.c.b16 %v193, %v192
    %v204 = vpack.c.b16 %v195, %v194
    %v205 = vpack.c.b16 %v197, %v196
    %214 = vmatprep.subr.bf16.mxu0 0
    %215 = vmatpush1.bf16.msra.mxu0 %v205
    %216 = vmatprep.subr.bf16.mxu0 0
    %217 = vmatpush1.bf16.msra.mxu0 %v204
    %218 = vmatprep.subr.bf16.mxu0 0
    %219 = vmatpush1.bf16.msra.mxu0 %v203
    %220 = vmatprep.subr.bf16.mxu0 0
    %221 = vmatpush1.bf16.msra.mxu0 %v202
    %222 = vmatprep.subr.bf16.mxu0 0
    %223 = vmatpush1.bf16.msra.mxu0 %v201
    %224 = vmatprep.subr.bf16.mxu0 0
    %225 = vmatpush1.bf16.msra.mxu0 %v200
    %226 = vmatprep.subr.bf16.mxu0 0
    %227 = vmatpush1.bf16.msra.mxu0 %v199
    %228 = vmatprep.subr.bf16.mxu0 0
    %229 = vmatpush1.bf16.msra.mxu0 %v198
    %230 = vmatprep.subr.bf16.mxu0 0
    %231 = vmatpush2.bf16.msra.mxu0 0
    %232 = vmatprep.subr.bf16.mxu0 0
    %233 = vmatpush2.bf16.msra.mxu0 0
    %234 = vmatprep.subr.bf16.mxu0 0
    %235 = vmatpush2.bf16.msra.mxu0 0
    %236 = vmatprep.subr.bf16.mxu0 0
    %237 = vmatpush2.bf16.msra.mxu0 0
    %238 = vmatprep.subr.bf16.mxu0 0
    %239 = vmatpush2.bf16.msra.mxu0 0
    %240 = vmatprep.subr.bf16.mxu0 0
    %241 = vmatpush2.bf16.msra.mxu0 0
    %242 = vmatprep.subr.bf16.mxu0 0
    %243 = vmatpush2.bf16.msra.mxu0 0
    %244 = vmatprep.subr.bf16.mxu0 0
    %245 = vmatpush2.bf16.msra.mxu0 0
    %246 = vmatprep.mubr.bf16.mxu0 0
    %247 = vmatmul.mubr.bf16.gmra.mxu0 %v142
    %v248 = vpop.f32.mrf.mxu0
    %v249 = vadd.f32 %v164, %v248
    %v250 = vpop.f32.mrf.mxu0
    %v251 = vpop.f32.mrf.mxu0
    %v252 = vpop.f32.mrf.mxu0
    %253 = vdwg.mxu0
    %v254 = vmax.f32 %v249, 0.0
    %v255 = vpack.c.bf16 %v254, %v254
    %v256 = vld [vmem:[#allocation8] sm:$0xf]
    %v257 = vld [vmem:[#allocation8 + $0x4] sm:$0xf]
    %v258 = vld [vmem:[#allocation8 + $0x8] sm:$0xf]
    %v259 = vld [vmem:[#allocation8 + $0xc] sm:$0xf]
    %v260 = vld [vmem:[#allocation8 + $0x10] sm:$0xf]
    %v261 = vld [vmem:[#allocation8 + $0x14] sm:$0xf]
    %v262 = vld [vmem:[#allocation8 + $0x18] sm:$0xf]
    %v263 = vld [vmem:[#allocation8 + $0x1c] sm:$0xf]
    %v264 = vld [vmem:[#allocation8 + $0x20] sm:$0xf]
    %v265 = vld [vmem:[#allocation8 + $0x24] sm:$0xf]
    %v266 = vld [vmem:[#allocation8 + $0x28] sm:$0xf]
    %v267 = vld [vmem:[#allocation8 + $0x2c] sm:$0xf]
    %v268 = vld [vmem:[#allocation8 + $0x30] sm:$0xf]
    %v269 = vld [vmem:[#allocation8 + $0x34] sm:$0xf]
    %v270 = vld [vmem:[#allocation8 + $0x38] sm:$0xf]
    %v271 = vld [vmem:[#allocation8 + $0x3c] sm:$0xf]
    %v272 = vld [vmem:[%s6] sm:$0x1]
    %v274 = vlaneseq
    %v275 = vshrl.u32 %v274, 7
    %v276 = vsub.s32 0, %v275
    %v277 = vrot.slane %v272, %v276
    %v295 = vunpack.c.l.b16 %v256
    %v296 = vunpack.c.l.b16 %v257
    %v297 = vunpack.c.l.b16 %v258
    %v298 = vunpack.c.l.b16 %v259
    %v299 = vunpack.c.l.b16 %v260
    %v300 = vunpack.c.l.b16 %v261
    %v301 = vunpack.c.l.b16 %v262
    %v302 = vunpack.c.l.b16 %v263
    %v303 = vunpack.c.l.b16 %v264
    %v304 = vunpack.c.l.b16 %v265
    %v305 = vunpack.c.l.b16 %v266
    %v306 = vunpack.c.l.b16 %v267
    %v307 = vunpack.c.l.b16 %v268
    %v308 = vunpack.c.l.b16 %v269
    %v309 = vunpack.c.l.b16 %v270
    %v310 = vunpack.c.l.b16 %v271
    %v311 = vpack.c.b16 %v296, %v295
    %v312 = vpack.c.b16 %v298, %v297
    %v313 = vpack.c.b16 %v300, %v299
    %v314 = vpack.c.b16 %v302, %v301
    %v315 = vpack.c.b16 %v304, %v303
    %v316 = vpack.c.b16 %v306, %v305
    %v317 = vpack.c.b16 %v308, %v307
    %v318 = vpack.c.b16 %v310, %v309
    %327 = vmatprep.subr.bf16.mxu0 0
    %328 = vmatpush1.bf16.msra.mxu0 %v318
    %329 = vmatprep.subr.bf16.mxu0 0
    %330 = vmatpush1.bf16.msra.mxu0 %v317
    %331 = vmatprep.subr.bf16.mxu0 0
    %332 = vmatpush1.bf16.msra.mxu0 %v316
    %333 = vmatprep.subr.bf16.mxu0 0
    %334 = vmatpush1.bf16.msra.mxu0 %v315
    %335 = vmatprep.subr.bf16.mxu0 0
    %336 = vmatpush1.bf16.msra.mxu0 %v314
    %337 = vmatprep.subr.bf16.mxu0 0
    %338 = vmatpush1.bf16.msra.mxu0 %v313
    %339 = vmatprep.subr.bf16.mxu0 0
    %340 = vmatpush1.bf16.msra.mxu0 %v312
    %341 = vmatprep.subr.bf16.mxu0 0
    %342 = vmatpush1.bf16.msra.mxu0 %v311
    %343 = vmatprep.subr.bf16.mxu0 0
    %344 = vmatpush2.bf16.msra.mxu0 0
    %345 = vmatprep.subr.bf16.mxu0 0
    %346 = vmatpush2.bf16.msra.mxu0 0
    %347 = vmatprep.subr.bf16.mxu0 0
    %348 = vmatpush2.bf16.msra.mxu0 0
    %349 = vmatprep.subr.bf16.mxu0 0
    %350 = vmatpush2.bf16.msra.mxu0 0
    %351 = vmatprep.subr.bf16.mxu0 0
    %352 = vmatpush2.bf16.msra.mxu0 0
    %353 = vmatprep.subr.bf16.mxu0 0
    %354 = vmatpush2.bf16.msra.mxu0 0
    %355 = vmatprep.subr.bf16.mxu0 0
    %356 = vmatpush2.bf16.msra.mxu0 0
    %357 = vmatprep.subr.bf16.mxu0 0
    %358 = vmatpush2.bf16.msra.mxu0 0
    %359 = vmatprep.mubr.bf16.mxu0 0
    %360 = vmatmul.mubr.bf16.gmra.mxu0 %v255
    %v361 = vpop.f32.mrf.mxu0
    %v362 = vadd.f32 %v277, %v361
    %v363 = vpop.f32.mrf.mxu0
    %v364 = vpop.f32.mrf.mxu0
    %v365 = vpop.f32.mrf.mxu0
    %366 = vdwg.mxu0
    %v367 = vtanh.pop %v362
    %v368 = vmul.f32 %v367, 2.0
    %369 = vst [vmem:[#allocation10] sm:$0xff] %v368
    // Predicated region
    $region46: #{tpu_custom_call.1} parent=1 // pred_check
      _
    $region47: #{tpu_custom_call.1} parent=1 // pred_check_branch
      %371 = sbr.rel (0) target = $region49
    $region48: #{tpu_custom_call.1} parent=1 // pred_region
      %s373 = ssub.s32 128, 128
      %374 = vsyncadd [#allocation4], %s373
      %s376 = sshll.u32 [#allocation10], 4
      %s377 = int_to_ptr.vmem [resolvable:$true] %s376
      %379 = dma.vmem_to_hbm [thread:$0]  %s377, 128, %s7, [#allocation4]
    $region49: #{tpu_custom_call.1} parent=1 // pred_fallthru
      _
    // Predicated region
    $region50: #{tpu_custom_call.1} parent=1 // pred_check
      _
    $region51: #{tpu_custom_call.1} parent=1 // pred_check_branch
      %381 = sbr.rel (0) target = $region53
    $region52: #{tpu_custom_call.1} parent=1 // pred_region
      %382 = dma.done [#allocation4], 128
    $region53: #{tpu_custom_call.1} parent=1 // pred_fallthru
      _
    %383 = vsyncpa [#allocation3], 1
    %384 = vsyncpa [#allocation6], 1
    %385 = vsyncpa [#allocation9], 1
    %386 = vsyncpa [#allocation4], 1

</llo_original>
